<compile_context>
chip_gen: v7x
topology: tpu7x:2x2x1
jax: 0.10.0
libtpu: 0.0.40
codegen_flags: <defaults>
</compile_context>

<pallas_src>
import functools

import numpy as np
import jax
import jax.numpy as jnp
from jax import lax
from jax.experimental import pallas as pl
from jax.experimental.pallas import tpu as pltpu

_LANE = 128                      # lane-dense last dim
_MIN_BLOCK_ELEMS = 8 * _LANE     # minimal (8, 128)-aligned tile
_TARGET_BLOCK_ELEMS = 512 * 1024  # ~2 MiB per f32 block (~8 MiB double-buffered in+out)


def _dropout_kernel(seed_ref, x_ref, o_ref, *, threshold, scale, block_rows, lane):
    # Global element index of every element in this block (tiling-independent).
    i = pl.program_id(0)
    row0 = (i * block_rows).astype(jnp.uint32)
    rows = lax.broadcasted_iota(jnp.uint32, x_ref.shape, 0) + row0
    lanes = lax.broadcasted_iota(jnp.uint32, x_ref.shape, 1)
    idx = rows * jnp.uint32(lane) + lanes

    # Counter-based PRNG: mix seed into the index, then a lowbias32-style hash.
    seed_mix = seed_ref[0].astype(jnp.uint32) * jnp.uint32(0x9E3779B9)
    h = idx ^ seed_mix
    h = h ^ (h >> 16)
    h = h * jnp.uint32(0x7FEB352D)
    h = h ^ (h >> 15)
    h = h * jnp.uint32(0x846CA68B)
    h = h ^ (h >> 16)

    keep = h >= jnp.uint32(threshold)            # P(keep) = 1 - p
    x = x_ref[...]
    o_ref[...] = jnp.where(keep,
                           x * jnp.asarray(scale, x.dtype),
                           jnp.asarray(0, x.dtype))


def _round_up(a, b):
    return (a + b - 1) // b * b


def dropout_pallas(x, seed, p=0.5, training=True):
    """Dropout over an arbitrary-shaped feature tensor (lane-dense tiling)."""
    if not training or p == 0.0:
        return x
    if p >= 1.0:
        return jnp.zeros_like(x)

    orig_shape = x.shape
    total = int(np.prod(orig_shape))

    block_elems = min(_TARGET_BLOCK_ELEMS, _round_up(total, _MIN_BLOCK_ELEMS))
    padded = _round_up(total, block_elems)
    grid = padded // block_elems
    block_rows = block_elems // _LANE
    rows = padded // _LANE

    flat = x.reshape(-1)
    if padded != total:
        flat = jnp.pad(flat, (0, padded - total))
    x2 = flat.reshape(rows, _LANE)

    # keep iff uniform uint32 >= p * 2^32  (<= 2^-32 bias when p*2^32 is not integral)
    threshold = int(min(int(p * (1 << 32)), (1 << 32) - 1))
    scale = 1.0 / (1.0 - p)

    seed_arr = jnp.asarray([seed], dtype=jnp.int32)
    kernel = functools.partial(_dropout_kernel, threshold=threshold, scale=scale,
                               block_rows=block_rows, lane=_LANE)

    itemsize = jnp.dtype(x.dtype).itemsize
    out2 = pl.pallas_call(
        kernel,
        out_shape=jax.ShapeDtypeStruct((rows, _LANE), x.dtype),
        grid_spec=pltpu.PrefetchScalarGridSpec(
            num_scalar_prefetch=1,               # seed lands in SMEM
            grid=(grid,),
            in_specs=[pl.BlockSpec((block_rows, _LANE), lambda i, seed: (i, 0))],
            out_specs=pl.BlockSpec((block_rows, _LANE), lambda i, seed: (i, 0)),
        ),
        compiler_params=pltpu.CompilerParams(
            dimension_semantics=("parallel",),   # hash PRNG -> blocks independent
        ),
        cost_estimate=pl.CostEstimate(
            flops=12 * padded,
            transcendentals=0,
            bytes_accessed=2 * padded * itemsize,
        ),
    )(seed_arr, x2)

    return out2.reshape(-1)[:total].reshape(orig_shape)


class DropoutModule:
    """Mirror of the PyTorch `Dropout` wrapper (forward only)."""

    def __init__(self, p=0.5, inplace=False):
        self.p = p
        self.inplace = inplace  # inplace is a no-op in functional JAX
        # TODO(synk): ME.SparseTensor coordinate_map_key / coordinate_manager
        # plumbing has no tensor compute; only the feature matrix is modeled.

    def __call__(self, features, seed=0, training=True):
        return dropout_pallas(features, seed, p=self.p, training=training)


if __name__ == "__main__":
    key = jax.random.PRNGKey(0)
    # Sparse tensor features: 128 nonzero points, 32 channels.
    N, C = 128, 32
    feats = jax.random.normal(key, (N, C), dtype=jnp.float32)

    module = DropoutModule(p=0.5, inplace=False)
    out = module(feats, seed=1234, training=True)
    out = jax.block_until_ready(out)

    # Light sanity checks: shape/dtype preserved, surviving elements are
    # exactly x / (1 - p), and some (but not all) elements were dropped.
    assert out.shape == feats.shape and out.dtype == feats.dtype
    out_np = np.asarray(out)
    feats_np = np.asarray(feats)
    kept = out_np != 0
    np.testing.assert_allclose(out_np[kept], (feats_np * 2.0)[kept], rtol=1e-6)
    assert 0 < int(kept.sum()) < feats_np.size

    # Eval mode is identity.
    out_eval = jax.block_until_ready(module(feats, seed=1234, training=False))
    np.testing.assert_allclose(np.asarray(out_eval), feats_np)

    print("KERNEL_OK")
</pallas_src>

<mosaic_0001>
module attributes {stable_mosaic.version = 11 : i64} {
  func.func @_dropout_kernel(%arg0: i32, %arg1: memref<1xi32, #tpu.memory_space<smem>>, %arg2: memref<32x128xf32, #tpu.memory_space<vmem>>, %arg3: memref<32x128xf32, #tpu.memory_space<vmem>>) attributes {dimension_semantics = [#tpu.dimension_semantics<parallel>], iteration_bounds = array<i64: 1>, scalar_prefetch = 1 : i64, scratch_operands = 0 : i64, tpu.core_type = #tpu.core_type<tc>, window_params = [{transform_indices = @transform_0, window_bounds = array<i64: 32, 128>}, {transform_indices = @transform_1, window_bounds = array<i64: 32, 128>}]} {
    %c32_i32 = arith.constant 32 : i32
    %0 = arith.muli %arg0, %c32_i32 : i32
    %1 = tpu.iota {dimensions = array<i32: 0>} : vector<32x128xi32>
    %2 = vector.broadcast %0 : i32 to vector<32x128xi32>
    %3 = arith.addi %1, %2 : vector<32x128xi32>
    %4 = tpu.iota {dimensions = array<i32: 1>} : vector<32x128xi32>
    %c128_i32 = arith.constant 128 : i32
    %5 = vector.broadcast %c128_i32 : i32 to vector<32x128xi32>
    %6 = arith.muli %3, %5 : vector<32x128xi32>
    %7 = arith.addi %6, %4 : vector<32x128xi32>
    %c0 = arith.constant 0 : index
    %8 = memref.load %arg1[%c0] : memref<1xi32, #tpu.memory_space<smem>>
    %c-1640531527_i32 = arith.constant -1640531527 : i32
    %9 = arith.muli %8, %c-1640531527_i32 : i32
    %10 = vector.broadcast %9 : i32 to vector<32x128xi32>
    %11 = arith.xori %7, %10 : vector<32x128xi32>
    %c16_i32 = arith.constant 16 : i32
    %12 = vector.broadcast %c16_i32 : i32 to vector<32x128xi32>
    %13 = arith.shrui %11, %12 : vector<32x128xi32>
    %14 = arith.xori %11, %13 : vector<32x128xi32>
    %c2146121005_i32 = arith.constant 2146121005 : i32
    %15 = vector.broadcast %c2146121005_i32 : i32 to vector<32x128xi32>
    %16 = arith.muli %14, %15 : vector<32x128xi32>
    %c15_i32 = arith.constant 15 : i32
    %17 = vector.broadcast %c15_i32 : i32 to vector<32x128xi32>
    %18 = arith.shrui %16, %17 : vector<32x128xi32>
    %19 = arith.xori %16, %18 : vector<32x128xi32>
    %c-2073254261_i32 = arith.constant -2073254261 : i32
    %20 = vector.broadcast %c-2073254261_i32 : i32 to vector<32x128xi32>
    %21 = arith.muli %19, %20 : vector<32x128xi32>
    %c16_i32_0 = arith.constant 16 : i32
    %22 = vector.broadcast %c16_i32_0 : i32 to vector<32x128xi32>
    %23 = arith.shrui %21, %22 : vector<32x128xi32>
    %24 = arith.xori %21, %23 : vector<32x128xi32>
    %c-2147483648_i32 = arith.constant -2147483648 : i32
    %25 = vector.broadcast %c-2147483648_i32 : i32 to vector<32x128xi32>
    %26 = arith.cmpi uge, %24, %25 : vector<32x128xi32>
    %c0_1 = arith.constant 0 : index
    %c0_2 = arith.constant 0 : index
    %27 = vector.load %arg2[%c0_1, %c0_2] : memref<32x128xf32, #tpu.memory_space<vmem>>, vector<32x128xf32>
    %cst = arith.constant 2.000000e+00 : f32
    %28 = vector.broadcast %cst : f32 to vector<32x128xf32>
    %29 = arith.mulf %27, %28 : vector<32x128xf32>
    %cst_3 = arith.constant 0.000000e+00 : f32
    %30 = vector.broadcast %cst_3 : f32 to vector<32x128xf32>
    %31 = arith.select %26, %29, %30 : vector<32x128xi1>, vector<32x128xf32>
    %c0_4 = arith.constant 0 : index
    %c0_5 = arith.constant 0 : index
    %32 = vector.load %arg3[%c0_4, %c0_5] : memref<32x128xf32, #tpu.memory_space<vmem>>, vector<32x128xf32>
    tpu.vector_store %arg3[%c0_4, %c0_5], %31 {strides = array<i32>} : memref<32x128xf32, #tpu.memory_space<vmem>>, vector<32x128xf32>,
    return
  }
  func.func @transform_0(%arg0: i32, %arg1: memref<1xi32, #tpu.memory_space<smem>>) -> (i32, i32) {
    %c0_i32 = arith.constant 0 : i32
    %c0_i32_0 = arith.constant 0 : i32
    return %arg0, %c0_i32 : i32, i32
  }
  func.func @transform_1(%arg0: i32, %arg1: memref<1xi32, #tpu.memory_space<smem>>) -> (i32, i32) {
    %c0_i32 = arith.constant 0 : i32
    %c0_i32_0 = arith.constant 0 : i32
    return %arg0, %c0_i32 : i32, i32
  }
}

</mosaic_0001>

<llo_original>
// kernel: tpu_custom_call.1
$region0: #{tpu_custom_call.1}
  #allocation0 [shape = 'u32[]', space=smem, size = 0x4, offset = 0x4, fixed_abs, tag = 'smem constant byte address 0x4 - core index']
  #allocation1 [shape = 'u32[144,128]{1,0:T(1,128)}', space=vmem, size = 0x12000, scoped, tag = 'internal scratch']
  #allocation2 [shape = 's32[1]{0}', space=sflag, size = 0x4, scoped, tag = 'scoped memory for tpu_custom_call.1']
  #allocation3 [shape = 's32[1]{0:T(128)S(6)}', space=smem, size = 0x200, scoped, tag = 'prefetched SMEM operand 0']
  %s0 = inlined_call_operand.<no memory space> [shape: s32[1], index: 0, kind: input, shape index: {}]
  %s1 = inlined_call_operand.hbm [shape: f32[32,128], index: 1, kind: input, shape index: {}]
  %s2 = inlined_call_operand.hbm [shape: f32[32,128], index: 2, kind: output, shape index: {}]
  %s3 = sld [smem:[#allocation0]]
  $region18: #{tpu_custom_call.1} parent=0
    _
  %s5 = ssub.s32 1, %s3
  %s6 = scalar_select 0, %s5, %s3
  %7 = sst [smem:[#allocation3]] %s0
  $region1: #{tpu_custom_call.1} parent=0
    #allocation4 [shape = 'u8[16384]{0}', space=vmem, size = 0x4000, scoped, tag = 'input window, operand 1, single buffered']
    #allocation5 [shape = 's32[1]{0}', space=sflag, size = 0x4, scoped, tag = 'scoped memory for tpu_custom_call.1']
    #allocation6 [shape = 's32[1]{0}', space=sflag, size = 0x4, scoped, tag = 'scoped memory for tpu_custom_call.1']
    #allocation7 [shape = 'u8[16384]{0}', space=vmem, size = 0x4000, scoped, tag = 'output window, operand 0, single buffered']
    %8 = vsyncpa [#allocation5], 0
    %9 = vsyncpa [#allocation6], 0
    // Predicated region
    $region2: #{tpu_custom_call.1} parent=1 // pred_check
      _
    $region3: #{tpu_custom_call.1} parent=1 // pred_check_branch
      %11 = sbr.rel (0) target = $region5
    $region4: #{tpu_custom_call.1} parent=1 // pred_region
      %s13 = ssub.s32 512, 512
      %14 = vsyncadd [#allocation5], %s13
      %s15 = sshll.u32 [#allocation4], 4
      %s16 = int_to_ptr.vmem [resolvable:$true] %s15
      %21 = dma.hbm_to_vmem [thread:$0]  %s1, 512, %s16, [#allocation5], 128, 128, 8
    $region5: #{tpu_custom_call.1} parent=1 // pred_fallthru
      _
    // Predicated region
    $region6: #{tpu_custom_call.1} parent=1 // pred_check
      _
    $region7: #{tpu_custom_call.1} parent=1 // pred_check_branch
      %23 = sbr.rel (0) target = $region9
    $region8: #{tpu_custom_call.1} parent=1 // pred_region
      %24 = dma.done [#allocation5], 512
    $region9: #{tpu_custom_call.1} parent=1 // pred_fallthru
      _
    %s25 = smul.u32 0, 32
    %v26 = vlaneseq
    %v27 = vshrl.u32 %v26, 7
    %v28 = vadd.s32 %v27, 8
    %v29 = vadd.s32 %v27, 16
    %v30 = vadd.s32 %v27, 24
    %v31 = vstv %s25
    %v32 = vadd.s32 %v27, %v31
    %v33 = vadd.s32 %v28, %v31
    %v34 = vadd.s32 %v29, %v31
    %v35 = vadd.s32 %v30, %v31
    %v36 = vlaneseq
    %v37 = vand.u32 %v36, 127
    %v38 = vmul.u32 %v32, 128
    %v39 = vmul.u32 %v33, 128
    %v40 = vmul.u32 %v34, 128
    %v41 = vmul.u32 %v35, 128
    %v42 = vadd.s32 %v38, %v37
    %v43 = vadd.s32 %v39, %v37
    %v44 = vadd.s32 %v40, %v37
    %v45 = vadd.s32 %v41, %v37
    %s46 = sld [smem:[#allocation3]]
    %s47 = smul.u32 %s46, 2654435769
    %v48 = vstv %s47
    %v49 = vxor.u32 %v42, %v48
    %v50 = vxor.u32 %v43, %v48
    %v51 = vxor.u32 %v44, %v48
    %v52 = vxor.u32 %v45, %v48
    %v53 = vshrl.u32 %v49, 16
    %v54 = vshrl.u32 %v50, 16
    %v55 = vshrl.u32 %v51, 16
    %v56 = vshrl.u32 %v52, 16
    %v57 = vxor.u32 %v49, %v53
    %v58 = vxor.u32 %v50, %v54
    %v59 = vxor.u32 %v51, %v55
    %v60 = vxor.u32 %v52, %v56
    %v61 = vmul.u32 %v57, 2146121005
    %v62 = vmul.u32 %v58, 2146121005
    %v63 = vmul.u32 %v59, 2146121005
    %v64 = vmul.u32 %v60, 2146121005
    %v65 = vshrl.u32 %v61, 15
    %v66 = vshrl.u32 %v62, 15
    %v67 = vshrl.u32 %v63, 15
    %v68 = vshrl.u32 %v64, 15
    %v69 = vxor.u32 %v61, %v65
    %v70 = vxor.u32 %v62, %v66
    %v71 = vxor.u32 %v63, %v67
    %v72 = vxor.u32 %v64, %v68
    %v73 = vmul.u32 %v69, 2221713035
    %v74 = vmul.u32 %v70, 2221713035
    %v75 = vmul.u32 %v71, 2221713035
    %v76 = vmul.u32 %v72, 2221713035
    %v77 = vshrl.u32 %v73, 16
    %v78 = vshrl.u32 %v74, 16
    %v79 = vshrl.u32 %v75, 16
    %v80 = vshrl.u32 %v76, 16
    %v81 = vxor.u32 %v73, %v77
    %v82 = vxor.u32 %v74, %v78
    %v83 = vxor.u32 %v75, %v79
    %v84 = vxor.u32 %v76, %v80
    %vm85 = vcmp.ge.u32.totalorder %v81, 2147483648
    %vm86 = vcmp.ge.u32.totalorder %v82, 2147483648
    %vm87 = vcmp.ge.u32.totalorder %v83, 2147483648
    %vm88 = vcmp.ge.u32.totalorder %v84, 2147483648
    %v89 = vld [vmem:[#allocation4] sm:$0xff]
    %v90 = vld [vmem:[#allocation4 + $0x8] sm:$0xff]
    %v91 = vld [vmem:[#allocation4 + $0x10] sm:$0xff]
    %v92 = vld [vmem:[#allocation4 + $0x18] sm:$0xff]
    %v93 = vmul.f32 %v89, 2.0
    %v94 = vmul.f32 %v90, 2.0
    %v95 = vmul.f32 %v91, 2.0
    %v96 = vmul.f32 %v92, 2.0
    %v97 = vsel %vm85, %v93, 0.0
    %v98 = vsel %vm86, %v94, 0.0
    %v99 = vsel %vm87, %v95, 0.0
    %v100 = vsel %vm88, %v96, 0.0
    %101 = vst [vmem:[#allocation7] sm:$0xff] %v97
    %102 = vst [vmem:[#allocation7 + $0x8] sm:$0xff] %v98
    %103 = vst [vmem:[#allocation7 + $0x10] sm:$0xff] %v99
    %104 = vst [vmem:[#allocation7 + $0x18] sm:$0xff] %v100
    // Predicated region
    $region10: #{tpu_custom_call.1} parent=1 // pred_check
      _
    $region11: #{tpu_custom_call.1} parent=1 // pred_check_branch
      %106 = sbr.rel (0) target = $region13
    $region12: #{tpu_custom_call.1} parent=1 // pred_region
      %s108 = ssub.s32 512, 512
      %109 = vsyncadd [#allocation6], %s108
      %s110 = sshll.u32 [#allocation7], 4
      %s111 = int_to_ptr.vmem [resolvable:$true] %s110
      %116 = dma.vmem_to_hbm [thread:$0]  %s111, 512, %s2, [#allocation6], 128, 128, 8
    $region13: #{tpu_custom_call.1} parent=1 // pred_fallthru
      _
    // Predicated region
    $region14: #{tpu_custom_call.1} parent=1 // pred_check
      _
    $region15: #{tpu_custom_call.1} parent=1 // pred_check_branch
      %118 = sbr.rel (0) target = $region17
    $region16: #{tpu_custom_call.1} parent=1 // pred_region
      %119 = dma.done [#allocation6], 512
    $region17: #{tpu_custom_call.1} parent=1 // pred_fallthru
      _
    %120 = vsyncpa [#allocation5], 1
    %121 = vsyncpa [#allocation6], 1

</llo_original>
